<compile_context>
chip_gen: v7x
topology: tpu7x:2x2x1
jax: 0.10.0
libtpu: 0.0.40
codegen_flags: <defaults>
</compile_context>

<pallas_src>
import jax
import jax.numpy as jnp
from jax.experimental import pallas as pl
from jax.experimental.pallas import tpu as pltpu

# ----------------------------- configuration --------------------------------
EDGE_DIM = 8
NODE_DIM = 8
PHI_DIM = 16
N_LAYERS = 2          # MLStruct.n_layers
D_MODEL = 64          # transformer d_model
NUM_TF_LAYERS = 2     # transformer num_layers
D_FF = 128            # transformer feed-forward width
EPS = 1e-8            # MLStruct.eps
LN_EPS = 1e-5
LANES = 128
VMEM_LIMIT = 32 * 1024 * 1024   # safe on v5e/v6e (128 MiB) and v7x (64 MiB)


def _round_up(x, m):
    return -(-x // m) * m


# ------------------------- kernel: pointwise 1->H->1 MLP --------------------
def apply_mlp1(x, params, max_rows_per_step=1024):
    """Pointwise MLP Linear(1,H) -> ReLU -> Linear(H,1) on a flat (M,) vector.

    Lane-dense layout: x -> (rows, 128) f32 tiles; weights are SMEM scalars,
    so each hidden unit is one broadcast fused VPU op over full vregs.
    (nn.Dropout inside f_edge is identity in eval mode.)
    """
    w1, b1, w2, b2 = params                       # (H,), (H,), (H,), (1,)
    H = int(w1.shape[0])
    M = int(x.shape[0])

    rows = max(8, _round_up(-(-M // LANES), 8))
    if rows > max_rows_per_step:
        block_rows = max_rows_per_step
    elif rows >= 512:
        block_rows = _round_up(rows // 2, 8)      # >=2 grid steps (v7x: 2 TCs)
    else:
        block_rows = rows
    rows = _round_up(rows, block_rows)
    Mp = rows * LANES
    xp = jnp.pad(x.reshape(-1).astype(jnp.float32), (0, Mp - M)).reshape(rows, LANES)

    def kernel(x_ref, w1_ref, b1_ref, w2_ref, b2_ref, o_ref):
        xv = x_ref[...]                                       # (block_rows, 128)
        acc = jnp.zeros_like(xv) + b2_ref[0]
        for j in range(H):                                    # static, small H
            acc = acc + w2_ref[j] * jnp.maximum(xv * w1_ref[j] + b1_ref[j], 0.0)
        o_ref[...] = acc

    smem = pl.BlockSpec(memory_space=pltpu.MemorySpace.SMEM)
    out = pl.pallas_call(
        kernel,
        out_shape=jax.ShapeDtypeStruct((rows, LANES), jnp.float32),
        grid_spec=pltpu.PrefetchScalarGridSpec(
            num_scalar_prefetch=0,
            grid=(rows // block_rows,),
            in_specs=[pl.BlockSpec((block_rows, LANES), lambda i: (i, 0)),
                      smem, smem, smem, smem],
            out_specs=pl.BlockSpec((block_rows, LANES), lambda i: (i, 0))),
        compiler_params=pltpu.CompilerParams(
            dimension_semantics=("parallel",),
            vmem_limit_bytes=VMEM_LIMIT),
    )(xp, w1, b1, w2, b2)
    return out.reshape(-1)[:M]


# ------------- kernel: per-layer Gram matrix + eps-filled node norms --------
def _gram_kernel(a_ref, nsf_ref, mask_ref, g_ref, n2_ref):
    m = a_ref[...] * nsf_ref[...]                 # (Np, Np): row i = A[i,:]*nsf
    # G[i,k] = sum_j M[i,j]*M[k,j]  ->  G[src,dst] == diag(mat_src @ mat_dst.T)[b]
    g_ref[...] = jax.lax.dot_general(
        m, m, dimension_numbers=(((1,), (1,)), ((), ())),
        preferred_element_type=jnp.float32)
    # random_fill: deterministic (eval-mode) eps on the N real columns only.
    # TODO(synk): original uses F.dropout(training=True) on the eps fill
    #             (random mask with p=f_dropout, kept entries scaled 1/(1-p)).
    me = m + EPS * mask_ref[...]
    n2_ref[...] = jnp.sum(me * me, axis=1, keepdims=True)    # (Np, 1)


def gram_and_norms(A, node_struct_feat):
    """One (N,N) MXU matmul + norms per layer instead of O(B*N) gathered rows."""
    N = int(A.shape[0])
    Np = _round_up(max(N, 8), LANES)
    a_p = jnp.pad(A.astype(jnp.float32), ((0, Np - N), (0, Np - N)))
    nsf_p = jnp.pad(node_struct_feat.reshape(1, -1).astype(jnp.float32),
                    ((0, 0), (0, Np - N)))
    mask = jnp.pad(jnp.ones((1, N), jnp.float32), ((0, 0), (0, Np - N)))
    # TODO(synk): single-block Gram kernel; tile over N for very large graphs.
    G, n2 = pl.pallas_call(
        _gram_kernel,
        out_shape=(jax.ShapeDtypeStruct((Np, Np), jnp.float32),
                   jax.ShapeDtypeStruct((Np, 1), jnp.float32)),
        compiler_params=pltpu.CompilerParams(vmem_limit_bytes=VMEM_LIMIT),
    )(a_p, nsf_p, mask)
    return G[:N, :N], n2[:N, 0]


# ---------- kernel: seq-len-1 TransformerEncoder (folded attn) + g_phi ------
def _layernorm_cols(x, g, b):
    # LayerNorm over the feature (sublane) axis of a feature-major (D, tb) tile.
    mu = jnp.mean(x, axis=0, keepdims=True)
    var = jnp.mean(jnp.square(x - mu), axis=0, keepdims=True)
    return (x - mu) * jax.lax.rsqrt(var + LN_EPS) * g + b


def _tf_kernel(x_ref, in_w_ref, in_b_ref, we_ref, be_ref, ln1g_ref, ln1b_ref,
               wf1_ref, bf1_ref, wf2_ref, bf2_ref, ln2g_ref, ln2b_ref,
               out_w_ref, out_b_ref, gw1_ref, gb1_ref, gw2_ref, gb2_ref,
               o_ref):
    x = x_ref[...]                                        # (1, tb) normalized scores
    # Input projection 1 -> D.  Feature-major: features on sublanes, batch on lanes.
    h = in_w_ref[...] * x + in_b_ref[...]                 # (D, tb)
    for l in range(NUM_TF_LAYERS):
        # seq-len-1 attention: softmax over a single key == 1, so Q/K cancel and
        # the value + output projections fold into one matmul (We = Wv@Wo).
        attn = jnp.dot(we_ref[l], h.astype(jnp.bfloat16),
                       preferred_element_type=jnp.float32) + be_ref[l]
        h = _layernorm_cols(h + attn, ln1g_ref[l], ln1b_ref[l])
        f = jnp.maximum(
            jnp.dot(wf1_ref[l], h.astype(jnp.bfloat16),
                    preferred_element_type=jnp.float32) + bf1_ref[l], 0.0)
        f = jnp.dot(wf2_ref[l], f.astype(jnp.bfloat16),
                    preferred_element_type=jnp.float32) + bf2_ref[l]
        h = _layernorm_cols(h + f, ln2g_ref[l], ln2b_ref[l])
    # Output projection D -> 1 (lane-dense row).
    y = jnp.sum(out_w_ref[...] * h, axis=0, keepdims=True) + out_b_ref[...]   # (1, tb)
    # g_phi: Linear(1, phi) -> ReLU -> Linear(phi, 1).
    g = jnp.maximum(gw1_ref[...] * y + gb1_ref[...], 0.0)                     # (PHI, tb)
    o = jnp.sum(gw2_ref[...] * g, axis=0, keepdims=True) + gb2_ref[...]       # (1, tb)
    o_ref[...] = o.astype(o_ref.dtype)


def prepare_tf_weights(tf_params, gphi_params):
    """Fold the seq-len-1 attention (Wv@Wo) and transpose everything into the
    feature-major layout used by _tf_kernel.  bf16 only on MXU matmul operands."""
    (in_w, in_b, wv, bv, wo, bo, ln1g, ln1b,
     wf1, bf1, wf2, bf2, ln2g, ln2b, out_w, out_b) = tf_params
    gw1, gb1, gw2, gb2 = gphi_params
    f32 = jnp.float32
    we = jnp.einsum('lij,ljk->lik', wv.astype(f32), wo.astype(f32))        # (L,D,D)
    be = jnp.einsum('lij,ljk->lik', bv.astype(f32), wo.astype(f32)) + bo   # (L,1,D)

    def col(v):                                  # (..., 1, D) -> (..., D, 1)
        return jnp.swapaxes(v.astype(f32), -1, -2)

    return [
        col(in_w), col(in_b),
        jnp.swapaxes(we, -1, -2).astype(jnp.bfloat16), col(be),
        col(ln1g), col(ln1b),
        jnp.swapaxes(wf1.astype(f32), -1, -2).astype(jnp.bfloat16), col(bf1),
        jnp.swapaxes(wf2.astype(f32), -1, -2).astype(jnp.bfloat16), col(bf2),
        col(ln2g), col(ln2b),
        col(out_w), out_b.astype(f32).reshape(1, 1),
        col(gw1), col(gb1), col(gw2), gb2.astype(f32).reshape(1, 1),
    ]


def struct_forward(x_scores, weights, tb=1024):
    """Seq-len-1 TransformerEncoder (folded attention) + g_phi over a batch of
    normalized structural scores.  Batch lives on the lane axis -> lane-dense
    (1, tb) input/output blocks and (D, tb) MXU matmuls."""
    B = int(x_scores.shape[0])
    Bq = _round_up(max(B, 1), LANES)
    if Bq >= 4 * LANES:                       # enough work: >=2 grid steps (v7x)
        n_steps = max(2, -(-Bq // tb))
        tb = _round_up(-(-Bq // n_steps), LANES)
    else:                                     # small batch: don't pad 32x
        tb = Bq
    Bp = _round_up(Bq, tb)
    x_row = jnp.pad(x_scores.reshape(-1).astype(jnp.float32),
                    (0, Bp - B)).reshape(1, Bp)

    def full_spec(a):
        nd = a.ndim
        return pl.BlockSpec(a.shape, lambda i, _nd=nd: (0,) * _nd)

    out = pl.pallas_call(
        _tf_kernel,
        out_shape=jax.ShapeDtypeStruct((1, Bp), jnp.float32),
        grid_spec=pltpu.PrefetchScalarGridSpec(
            num_scalar_prefetch=0,
            grid=(Bp // tb,),
            in_specs=[pl.BlockSpec((1, tb), lambda i: (0, i))]
                     + [full_spec(w) for w in weights],
            out_specs=pl.BlockSpec((1, tb), lambda i: (0, i))),
        compiler_params=pltpu.CompilerParams(
            dimension_semantics=("parallel",),
            vmem_limit_bytes=VMEM_LIMIT),
    )(x_row, *weights)
    return out[0, :B][:, None]


# ------------------------------ parameters ----------------------------------
def init_params(key):
    keys = iter(jax.random.split(key, 128))

    def nrm(shape, scale=0.2):
        return (scale * jax.random.normal(next(keys), shape)).astype(jnp.float32)

    # self.cns : per layer (f_edge, f_node, g_phi), each MLP 1 -> H -> 1
    cns = []
    for _ in range(N_LAYERS):
        f_edge = (nrm((EDGE_DIM,)), nrm((EDGE_DIM,)), nrm((EDGE_DIM,)), nrm((1,)))
        f_node = (nrm((NODE_DIM,)), nrm((NODE_DIM,)), nrm((NODE_DIM,)), nrm((1,)))
        g_phi = (nrm((1, PHI_DIM)), nrm((1, PHI_DIM)), nrm((1, PHI_DIM)), nrm((1, 1)))
        cns.append((f_edge, f_node, g_phi))

    # TODO(synk): TransformerEncoder class body is not part of the provided
    # source; a standard post-norm encoder with a 1->d_model input projection
    # and d_model->1 output projection is used.
    L, D, F = NUM_TF_LAYERS, D_MODEL, D_FF
    tf = (
        nrm((1, D)), nrm((1, D)),                                             # in_w, in_b
        nrm((L, D, D), 0.1), nrm((L, 1, D)),                                  # Wv, bv
        nrm((L, D, D), 0.1), nrm((L, 1, D)),                                  # Wo, bo
        jnp.ones((L, 1, D), jnp.float32), jnp.zeros((L, 1, D), jnp.float32),  # ln1 g,b
        nrm((L, D, F), 0.1), nrm((L, 1, F)),                                  # Wff1, bff1
        nrm((L, F, D), 0.1), nrm((L, 1, D)),                                  # Wff2, bff2
        jnp.ones((L, 1, D), jnp.float32), jnp.zeros((L, 1, D), jnp.float32),  # ln2 g,b
        nrm((1, D)), nrm((1, 1)),                                             # out_w, out_b
    )
    return cns, tf


# ------------------------------ forward pass ---------------------------------
def mlstruct_forward(graphs, query_edges, cns_params, tf_params):
    """graphs[l] = (A, w): dense 0/1 adjacency (N,N) and per-edge weights (E,)
    in row-major ('srcdst') nonzero order.  query_edges[l] = (src_idx, dst_idx).
    Glue (nonzero / segment_sum / B-element gathers) is eager-only, not jit-able."""
    out_structs = []
    node_struct_feats = []
    for l in range(N_LAYERS):
        A, w = graphs[l]
        src_q, dst_q = query_edges[l]
        N = A.shape[0]
        rows, cols = jnp.nonzero(A)          # glue: DGL g.edges(order='srcdst')
        f_edge_p, f_node_p, g_phi_p = cns_params[l]

        # edge_weight_A = f_edge(edge_weights.unsqueeze(-1))        (Pallas)
        edge_weight_A = apply_mlp1(w, f_edge_p)                              # (E,)
        # node_struct_feat = scatter_add(edge_weight_A, cols)       (glue)
        nsf_sum = jax.ops.segment_sum(edge_weight_A, cols, num_segments=N)
        # node_struct_feat = f_node(node_struct_feat)               (Pallas)
        node_struct_feat = apply_mlp1(nsf_sum, f_node_p)                     # (N,)
        node_struct_feats.append(node_struct_feat[:, None])

        B = int(src_q.shape[0])
        if B <= 0:
            out_structs.append(None)
            continue

        # Gram matrix + eps-filled per-node squared norms (Pallas, once per layer),
        # then the per-edge normalized score is a B-element gather (glue).
        G, n2 = gram_and_norms(A, node_struct_feat)
        src = src_q.astype(jnp.int32)
        dst = dst_q.astype(jnp.int32)
        x = G[src, dst] * jax.lax.rsqrt(n2[src] * n2[dst])                   # (B,)

        # transformer (folded attention) + g_phi  (Pallas, lane-dense batch)
        weights = prepare_tf_weights(tf_params, g_phi_p)
        out = struct_forward(x, weights)
        out_structs.append(out)
    return out_structs, node_struct_feats


# ----------------------------------- main ------------------------------------
if __name__ == "__main__":
    key = jax.random.PRNGKey(0)
    k_par, k_g = jax.random.split(key)
    cns_params, tf_params = init_params(k_par)

    NUM_NODES = 16
    BATCH = 8          # number of query edges per layer ("batch_size")
    graphs = []
    query_edges = []
    gk = k_g
    for _ in range(N_LAYERS):
        gk, k_a, k_w, k_s, k_d = jax.random.split(gk, 5)
        A = (jax.random.uniform(k_a, (NUM_NODES, NUM_NODES)) < 0.35).astype(jnp.float32)
        E = int(jnp.sum(A))
        w = jax.random.uniform(k_w, (E,), minval=0.1, maxval=1.0)
        graphs.append((A, w))
        src_q = jax.random.randint(k_s, (BATCH,), 0, NUM_NODES)
        dst_q = jax.random.randint(k_d, (BATCH,), 0, NUM_NODES)
        query_edges.append((src_q, dst_q))

    out_structs, node_struct_feats = mlstruct_forward(
        graphs, query_edges, cns_params, tf_params)
    jax.block_until_ready(out_structs)
    jax.block_until_ready(node_struct_feats)

    for l in range(N_LAYERS):
        assert out_structs[l].shape == (BATCH, 1)
        assert node_struct_feats[l].shape == (NUM_NODES, 1)
        assert bool(jnp.all(jnp.isfinite(out_structs[l])))
        assert bool(jnp.all(jnp.isfinite(node_struct_feats[l])))

    print("KERNEL_OK")
</pallas_src>

<mosaic_0001>
module attributes {stable_mosaic.version = 11 : i64} {
  func.func @kernel(%arg0: i32, %arg1: memref<8x128xf32, #tpu.memory_space<vmem>>, %arg2: memref<8xf32, #tpu.memory_space<smem>>, %arg3: memref<8xf32, #tpu.memory_space<smem>>, %arg4: memref<8xf32, #tpu.memory_space<smem>>, %arg5: memref<1xf32, #tpu.memory_space<smem>>, %arg6: memref<8x128xf32, #tpu.memory_space<vmem>>) attributes {dimension_semantics = [#tpu.dimension_semantics<parallel>], iteration_bounds = array<i64: 1>, scalar_prefetch = 0 : i64, scratch_operands = 0 : i64, tpu.core_type = #tpu.core_type<tc>, window_params = [{transform_indices = @transform_0, window_bounds = array<i64: 8, 128>}, {transform_indices = @transform_1, window_bounds = array<i64: 8>}, {transform_indices = @transform_2, window_bounds = array<i64: 8>}, {transform_indices = @transform_3, window_bounds = array<i64: 8>}, {transform_indices = @transform_4, window_bounds = array<i64: 1>}, {transform_indices = @transform_5, window_bounds = array<i64: 8, 128>}]} {
    %c0 = arith.constant 0 : index
    %c0_0 = arith.constant 0 : index
    %0 = vector.load %arg1[%c0, %c0_0] : memref<8x128xf32, #tpu.memory_space<vmem>>, vector<8x128xf32>
    %cst = arith.constant 0.000000e+00 : f32
    %1 = vector.broadcast %cst : f32 to vector<8x128xf32>
    %c0_1 = arith.constant 0 : index
    %2 = memref.load %arg5[%c0_1] : memref<1xf32, #tpu.memory_space<smem>>
    %3 = vector.broadcast %2 : f32 to vector<8x128xf32>
    %4 = arith.addf %1, %3 : vector<8x128xf32>
    %c0_2 = arith.constant 0 : index
    %5 = memref.load %arg4[%c0_2] : memref<8xf32, #tpu.memory_space<smem>>
    %c0_3 = arith.constant 0 : index
    %6 = memref.load %arg2[%c0_3] : memref<8xf32, #tpu.memory_space<smem>>
    %7 = vector.broadcast %6 : f32 to vector<8x128xf32>
    %8 = arith.mulf %0, %7 : vector<8x128xf32>
    %c0_4 = arith.constant 0 : index
    %9 = memref.load %arg3[%c0_4] : memref<8xf32, #tpu.memory_space<smem>>
    %10 = vector.broadcast %9 : f32 to vector<8x128xf32>
    %11 = arith.addf %8, %10 : vector<8x128xf32>
    %cst_5 = arith.constant 0.000000e+00 : f32
    %12 = vector.broadcast %cst_5 : f32 to vector<8x128xf32>
    %13 = arith.maximumf %11, %12 : vector<8x128xf32>
    %14 = vector.broadcast %5 : f32 to vector<8x128xf32>
    %15 = arith.mulf %14, %13 : vector<8x128xf32>
    %16 = arith.addf %4, %15 : vector<8x128xf32>
    %c1 = arith.constant 1 : index
    %17 = memref.load %arg4[%c1] : memref<8xf32, #tpu.memory_space<smem>>
    %c1_6 = arith.constant 1 : index
    %18 = memref.load %arg2[%c1_6] : memref<8xf32, #tpu.memory_space<smem>>
    %19 = vector.broadcast %18 : f32 to vector<8x128xf32>
    %20 = arith.mulf %0, %19 : vector<8x128xf32>
    %c1_7 = arith.constant 1 : index
    %21 = memref.load %arg3[%c1_7] : memref<8xf32, #tpu.memory_space<smem>>
    %22 = vector.broadcast %21 : f32 to vector<8x128xf32>
    %23 = arith.addf %20, %22 : vector<8x128xf32>
    %cst_8 = arith.constant 0.000000e+00 : f32
    %24 = vector.broadcast %cst_8 : f32 to vector<8x128xf32>
    %25 = arith.maximumf %23, %24 : vector<8x128xf32>
    %26 = vector.broadcast %17 : f32 to vector<8x128xf32>
    %27 = arith.mulf %26, %25 : vector<8x128xf32>
    %28 = arith.addf %16, %27 : vector<8x128xf32>
    %c2 = arith.constant 2 : index
    %29 = memref.load %arg4[%c2] : memref<8xf32, #tpu.memory_space<smem>>
    %c2_9 = arith.constant 2 : index
    %30 = memref.load %arg2[%c2_9] : memref<8xf32, #tpu.memory_space<smem>>
    %31 = vector.broadcast %30 : f32 to vector<8x128xf32>
    %32 = arith.mulf %0, %31 : vector<8x128xf32>
    %c2_10 = arith.constant 2 : index
    %33 = memref.load %arg3[%c2_10] : memref<8xf32, #tpu.memory_space<smem>>
    %34 = vector.broadcast %33 : f32 to vector<8x128xf32>
    %35 = arith.addf %32, %34 : vector<8x128xf32>
    %cst_11 = arith.constant 0.000000e+00 : f32
    %36 = vector.broadcast %cst_11 : f32 to vector<8x128xf32>
    %37 = arith.maximumf %35, %36 : vector<8x128xf32>
    %38 = vector.broadcast %29 : f32 to vector<8x128xf32>
    %39 = arith.mulf %38, %37 : vector<8x128xf32>
    %40 = arith.addf %28, %39 : vector<8x128xf32>
    %c3 = arith.constant 3 : index
    %41 = memref.load %arg4[%c3] : memref<8xf32, #tpu.memory_space<smem>>
    %c3_12 = arith.constant 3 : index
    %42 = memref.load %arg2[%c3_12] : memref<8xf32, #tpu.memory_space<smem>>
    %43 = vector.broadcast %42 : f32 to vector<8x128xf32>
    %44 = arith.mulf %0, %43 : vector<8x128xf32>
    %c3_13 = arith.constant 3 : index
    %45 = memref.load %arg3[%c3_13] : memref<8xf32, #tpu.memory_space<smem>>
    %46 = vector.broadcast %45 : f32 to vector<8x128xf32>
    %47 = arith.addf %44, %46 : vector<8x128xf32>
    %cst_14 = arith.constant 0.000000e+00 : f32
    %48 = vector.broadcast %cst_14 : f32 to vector<8x128xf32>
    %49 = arith.maximumf %47, %48 : vector<8x128xf32>
    %50 = vector.broadcast %41 : f32 to vector<8x128xf32>
    %51 = arith.mulf %50, %49 : vector<8x128xf32>
    %52 = arith.addf %40, %51 : vector<8x128xf32>
    %c4 = arith.constant 4 : index
    %53 = memref.load %arg4[%c4] : memref<8xf32, #tpu.memory_space<smem>>
    %c4_15 = arith.constant 4 : index
    %54 = memref.load %arg2[%c4_15] : memref<8xf32, #tpu.memory_space<smem>>
    %55 = vector.broadcast %54 : f32 to vector<8x128xf32>
    %56 = arith.mulf %0, %55 : vector<8x128xf32>
    %c4_16 = arith.constant 4 : index
    %57 = memref.load %arg3[%c4_16] : memref<8xf32, #tpu.memory_space<smem>>
    %58 = vector.broadcast %57 : f32 to vector<8x128xf32>
    %59 = arith.addf %56, %58 : vector<8x128xf32>
    %cst_17 = arith.constant 0.000000e+00 : f32
    %60 = vector.broadcast %cst_17 : f32 to vector<8x128xf32>
    %61 = arith.maximumf %59, %60 : vector<8x128xf32>
    %62 = vector.broadcast %53 : f32 to vector<8x128xf32>
    %63 = arith.mulf %62, %61 : vector<8x128xf32>
    %64 = arith.addf %52, %63 : vector<8x128xf32>
    %c5 = arith.constant 5 : index
    %65 = memref.load %arg4[%c5] : memref<8xf32, #tpu.memory_space<smem>>
    %c5_18 = arith.constant 5 : index
    %66 = memref.load %arg2[%c5_18] : memref<8xf32, #tpu.memory_space<smem>>
    %67 = vector.broadcast %66 : f32 to vector<8x128xf32>
    %68 = arith.mulf %0, %67 : vector<8x128xf32>
    %c5_19 = arith.constant 5 : index
    %69 = memref.load %arg3[%c5_19] : memref<8xf32, #tpu.memory_space<smem>>
    %70 = vector.broadcast %69 : f32 to vector<8x128xf32>
    %71 = arith.addf %68, %70 : vector<8x128xf32>
    %cst_20 = arith.constant 0.000000e+00 : f32
    %72 = vector.broadcast %cst_20 : f32 to vector<8x128xf32>
    %73 = arith.maximumf %71, %72 : vector<8x128xf32>
    %74 = vector.broadcast %65 : f32 to vector<8x128xf32>
    %75 = arith.mulf %74, %73 : vector<8x128xf32>
    %76 = arith.addf %64, %75 : vector<8x128xf32>
    %c6 = arith.constant 6 : index
    %77 = memref.load %arg4[%c6] : memref<8xf32, #tpu.memory_space<smem>>
    %c6_21 = arith.constant 6 : index
    %78 = memref.load %arg2[%c6_21] : memref<8xf32, #tpu.memory_space<smem>>
    %79 = vector.broadcast %78 : f32 to vector<8x128xf32>
    %80 = arith.mulf %0, %79 : vector<8x128xf32>
    %c6_22 = arith.constant 6 : index
    %81 = memref.load %arg3[%c6_22] : memref<8xf32, #tpu.memory_space<smem>>
    %82 = vector.broadcast %81 : f32 to vector<8x128xf32>
    %83 = arith.addf %80, %82 : vector<8x128xf32>
    %cst_23 = arith.constant 0.000000e+00 : f32
    %84 = vector.broadcast %cst_23 : f32 to vector<8x128xf32>
    %85 = arith.maximumf %83, %84 : vector<8x128xf32>
    %86 = vector.broadcast %77 : f32 to vector<8x128xf32>
    %87 = arith.mulf %86, %85 : vector<8x128xf32>
    %88 = arith.addf %76, %87 : vector<8x128xf32>
    %c7 = arith.constant 7 : index
    %89 = memref.load %arg4[%c7] : memref<8xf32, #tpu.memory_space<smem>>
    %c7_24 = arith.constant 7 : index
    %90 = memref.load %arg2[%c7_24] : memref<8xf32, #tpu.memory_space<smem>>
    %91 = vector.broadcast %90 : f32 to vector<8x128xf32>
    %92 = arith.mulf %0, %91 : vector<8x128xf32>
    %c7_25 = arith.constant 7 : index
    %93 = memref.load %arg3[%c7_25] : memref<8xf32, #tpu.memory_space<smem>>
    %94 = vector.broadcast %93 : f32 to vector<8x128xf32>
    %95 = arith.addf %92, %94 : vector<8x128xf32>
    %cst_26 = arith.constant 0.000000e+00 : f32
    %96 = vector.broadcast %cst_26 : f32 to vector<8x128xf32>
    %97 = arith.maximumf %95, %96 : vector<8x128xf32>
    %98 = vector.broadcast %89 : f32 to vector<8x128xf32>
    %99 = arith.mulf %98, %97 : vector<8x128xf32>
    %100 = arith.addf %88, %99 : vector<8x128xf32>
    %c0_27 = arith.constant 0 : index
    %c0_28 = arith.constant 0 : index
    %101 = vector.load %arg6[%c0_27, %c0_28] : memref<8x128xf32, #tpu.memory_space<vmem>>, vector<8x128xf32>
    tpu.vector_store %arg6[%c0_27, %c0_28], %100 {strides = array<i32>} : memref<8x128xf32, #tpu.memory_space<vmem>>, vector<8x128xf32>,
    return
  }
  func.func @transform_0(%arg0: i32) -> (i32, i32) {
    %c0_i32 = arith.constant 0 : i32
    %c0_i32_0 = arith.constant 0 : i32
    return %arg0, %c0_i32 : i32, i32
  }
  func.func @transform_1(%arg0: i32) -> i32 {
    %c0_i32 = arith.constant 0 : i32
    %c0_i32_0 = arith.constant 0 : i32
    return %c0_i32 : i32
  }
  func.func @transform_2(%arg0: i32) -> i32 {
    %c0_i32 = arith.constant 0 : i32
    %c0_i32_0 = arith.constant 0 : i32
    return %c0_i32 : i32
  }
  func.func @transform_3(%arg0: i32) -> i32 {
    %c0_i32 = arith.constant 0 : i32
    %c0_i32_0 = arith.constant 0 : i32
    return %c0_i32 : i32
  }
  func.func @transform_4(%arg0: i32) -> i32 {
    %c0_i32 = arith.constant 0 : i32
    %c0_i32_0 = arith.constant 0 : i32
    return %c0_i32 : i32
  }
  func.func @transform_5(%arg0: i32) -> (i32, i32) {
    %c0_i32 = arith.constant 0 : i32
    %c0_i32_0 = arith.constant 0 : i32
    return %arg0, %c0_i32 : i32, i32
  }
}

</mosaic_0001>

<llo_original>
// kernel: tpu_custom_call.1
$region0: #{tpu_custom_call.1}
  #allocation0 [shape = 'u32[]', space=smem, size = 0x4, offset = 0x4, fixed_abs, tag = 'smem constant byte address 0x4 - core index']
  #allocation1 [shape = 'u32[144,128]{1,0:T(1,128)}', space=vmem, size = 0x12000, scoped, tag = 'internal scratch']
  #allocation2 [shape = 'f32[1]{0:T(128)S(6)}', space=smem, size = 0x200, scoped, tag = 'scoped memory for tpu_custom_call.1']
  %s0 = inlined_call_operand.hbm [shape: f32[8,128], index: 0, kind: input, shape index: {}]
  %s1 = inlined_call_operand.vmem [shape: f32[8], index: 1, kind: input, shape index: {}]
  %s2 = inlined_call_operand.vmem [shape: f32[8], index: 2, kind: input, shape index: {}]
  %s3 = inlined_call_operand.vmem [shape: f32[8], index: 3, kind: input, shape index: {}]
  %s4 = inlined_call_operand.<no memory space> [shape: f32[1], index: 4, kind: input, shape index: {}]
  %s5 = inlined_call_operand.hbm [shape: f32[8,128], index: 5, kind: output, shape index: {}]
  %s6 = sld [smem:[#allocation0]]
  $region46: #{tpu_custom_call.1} parent=0
    _
  %s8 = ssub.s32 1, %s6
  %s9 = scalar_select 0, %s8, %s6
  %10 = sst [smem:[#allocation2]] %s4
  $region1: #{tpu_custom_call.1} parent=0
    #allocation3 [shape = 'u8[4096]{0}', space=vmem, size = 0x1000, scoped, tag = 'input window, operand 0, single buffered']
    #allocation4 [shape = 's32[1]{0}', space=sflag, size = 0x4, scoped, tag = 'scoped memory for tpu_custom_call.1']
    #allocation5 [shape = 's32[1]{0}', space=sflag, size = 0x4, scoped, tag = 'scoped memory for tpu_custom_call.1']
    #allocation6 [shape = 's32[1]{0}', space=sflag, size = 0x4, scoped, tag = 'scoped memory for tpu_custom_call.1']
    #allocation7 [shape = 'u8[512]{0}', space=smem, size = 0x200, scoped, tag = 'input window, operand 1, single buffered']
    #allocation8 [shape = 'u8[512]{0}', space=smem, size = 0x200, scoped, tag = 'input window, operand 2, single buffered']
    #allocation9 [shape = 's32[1]{0}', space=sflag, size = 0x4, scoped, tag = 'scoped memory for tpu_custom_call.1']
    #allocation10 [shape = 'u8[512]{0}', space=smem, size = 0x200, scoped, tag = 'input window, operand 3, single buffered']
    #allocation11 [shape = 'u8[4096]{0}', space=vmem, size = 0x1000, scoped, tag = 'output window, operand 0, single buffered']
    %11 = vsyncpa [#allocation4], 0
    %12 = vsyncpa [#allocation6], 0
    %13 = vsyncpa [#allocation9], 0
    %14 = vsyncpa [#allocation5], 0
    // Predicated region
    $region2: #{tpu_custom_call.1} parent=1 // pred_check
      _
    $region3: #{tpu_custom_call.1} parent=1 // pred_check_branch
      %16 = sbr.rel (0) target = $region5
    $region4: #{tpu_custom_call.1} parent=1 // pred_region
      %s18 = ssub.s32 128, 128
      %19 = vsyncadd [#allocation4], %s18
      %s21 = sshll.u32 [#allocation3], 4
      %s22 = int_to_ptr.vmem [resolvable:$true] %s21
      %24 = dma.hbm_to_vmem [thread:$0]  %s0, 128, %s22, [#allocation4]
    $region5: #{tpu_custom_call.1} parent=1 // pred_fallthru
      _
    // Predicated region
    $region6: #{tpu_custom_call.1} parent=1 // pred_check
      _
    $region7: #{tpu_custom_call.1} parent=1 // pred_check_branch
      %26 = sbr.rel (0) target = $region9
    $region8: #{tpu_custom_call.1} parent=1 // pred_region
      %s28 = ssub.s32 16, 16
      %29 = vsyncadd [#allocation6], %s28
      %s31 = sshll.u32 %s1, 4
      %s32 = int_to_ptr.vmem [resolvable:$true] %s31
      %34 = dma.vmem_to_smem %s32, 16, [#allocation7], [#allocation6]
    $region9: #{tpu_custom_call.1} parent=1 // pred_fallthru
      _
    // Predicated region
    $region10: #{tpu_custom_call.1} parent=1 // pred_check
      _
    $region11: #{tpu_custom_call.1} parent=1 // pred_check_branch
      %36 = sbr.rel (0) target = $region13
    $region12: #{tpu_custom_call.1} parent=1 // pred_region
      %s38 = ssub.s32 16, 16
      %39 = vsyncadd [#allocation9], %s38
      %s41 = sshll.u32 %s2, 4
      %s42 = int_to_ptr.vmem [resolvable:$true] %s41
      %44 = dma.vmem_to_smem %s42, 16, [#allocation8], [#allocation9]
    $region13: #{tpu_custom_call.1} parent=1 // pred_fallthru
      _
    // Predicated region
    $region14: #{tpu_custom_call.1} parent=1 // pred_check
      _
    $region15: #{tpu_custom_call.1} parent=1 // pred_check_branch
      %46 = sbr.rel (0) target = $region17
    $region16: #{tpu_custom_call.1} parent=1 // pred_region
      %s48 = ssub.s32 16, 16
      %49 = vsyncadd [#allocation9], %s48
      %s51 = sshll.u32 %s3, 4
      %s52 = int_to_ptr.vmem [resolvable:$true] %s51
      %54 = dma.vmem_to_smem %s52, 16, [#allocation10], [#allocation9]
    $region17: #{tpu_custom_call.1} parent=1 // pred_fallthru
      _
    // Predicated region
    $region18: #{tpu_custom_call.1} parent=1 // pred_check
      _
    $region19: #{tpu_custom_call.1} parent=1 // pred_check_branch
      %56 = sbr.rel (0) target = $region21
    $region20: #{tpu_custom_call.1} parent=1 // pred_region
      _
    $region21: #{tpu_custom_call.1} parent=1 // pred_fallthru
      _
    // Predicated region
    $region22: #{tpu_custom_call.1} parent=1 // pred_check
      _
    $region23: #{tpu_custom_call.1} parent=1 // pred_check_branch
      %58 = sbr.rel (0) target = $region25
    $region24: #{tpu_custom_call.1} parent=1 // pred_region
      %59 = dma.done [#allocation4], 128
    $region25: #{tpu_custom_call.1} parent=1 // pred_fallthru
      _
    // Predicated region
    $region26: #{tpu_custom_call.1} parent=1 // pred_check
      _
    $region27: #{tpu_custom_call.1} parent=1 // pred_check_branch
      %61 = sbr.rel (0) target = $region29
    $region28: #{tpu_custom_call.1} parent=1 // pred_region
      %62 = dma.done [#allocation6], 16
    $region29: #{tpu_custom_call.1} parent=1 // pred_fallthru
      _
    // Predicated region
    $region30: #{tpu_custom_call.1} parent=1 // pred_check
      _
    $region31: #{tpu_custom_call.1} parent=1 // pred_check_branch
      %64 = sbr.rel (0) target = $region33
    $region32: #{tpu_custom_call.1} parent=1 // pred_region
      %65 = dma.done [#allocation9], 16
    $region33: #{tpu_custom_call.1} parent=1 // pred_fallthru
      _
    // Predicated region
    $region34: #{tpu_custom_call.1} parent=1 // pred_check
      _
    $region35: #{tpu_custom_call.1} parent=1 // pred_check_branch
      %67 = sbr.rel (0) target = $region37
    $region36: #{tpu_custom_call.1} parent=1 // pred_region
      %68 = dma.done [#allocation9], 16
    $region37: #{tpu_custom_call.1} parent=1 // pred_fallthru
      _
    %69 = sfence
    %v70 = vld [vmem:[#allocation3] sm:$0xff]
    %s71 = sld [smem:[#allocation2]]
    %v72 = vstv %s71
    %v73 = vadd.f32 %v72, 0.0
    %s74 = sld [smem:[#allocation10]]
    %s75 = sld [smem:[#allocation7]]
    %v76 = vstv %s75
    %v77 = vmul.f32 %v70, %v76
    %s78 = sld [smem:[#allocation8]]
    %v79 = vstv %s78
    %v80 = vadd.f32 %v77, %v79
    %v81 = vmax.f32 %v80, 0.0
    %v82 = vstv %s74
    %v83 = vmul.f32 %v82, %v81
    %v84 = vadd.f32 %v73, %v83
    %s85 = sld [smem:[#allocation10 + $0x1]]
    %s86 = sld [smem:[#allocation7 + $0x1]]
    %v87 = vstv %s86
    %v88 = vmul.f32 %v70, %v87
    %s89 = sld [smem:[#allocation8 + $0x1]]
    %v90 = vstv %s89
    %v91 = vadd.f32 %v88, %v90
    %v92 = vmax.f32 %v91, 0.0
    %v93 = vstv %s85
    %v94 = vmul.f32 %v93, %v92
    %v95 = vadd.f32 %v84, %v94
    %s96 = sld [smem:[#allocation10 + $0x2]]
    %s97 = sld [smem:[#allocation7 + $0x2]]
    %v98 = vstv %s97
    %v99 = vmul.f32 %v70, %v98
    %s100 = sld [smem:[#allocation8 + $0x2]]
    %v101 = vstv %s100
    %v102 = vadd.f32 %v99, %v101
    %v103 = vmax.f32 %v102, 0.0
    %v104 = vstv %s96
    %v105 = vmul.f32 %v104, %v103
    %v106 = vadd.f32 %v95, %v105
    %s107 = sld [smem:[#allocation10 + $0x3]]
    %s108 = sld [smem:[#allocation7 + $0x3]]
    %v109 = vstv %s108
    %v110 = vmul.f32 %v70, %v109
    %s111 = sld [smem:[#allocation8 + $0x3]]
    %v112 = vstv %s111
    %v113 = vadd.f32 %v110, %v112
    %v114 = vmax.f32 %v113, 0.0
    %v115 = vstv %s107
    %v116 = vmul.f32 %v115, %v114
    %v117 = vadd.f32 %v106, %v116
    %s118 = sld [smem:[#allocation10 + $0x4]]
    %s119 = sld [smem:[#allocation7 + $0x4]]
    %v120 = vstv %s119
    %v121 = vmul.f32 %v70, %v120
    %s122 = sld [smem:[#allocation8 + $0x4]]
    %v123 = vstv %s122
    %v124 = vadd.f32 %v121, %v123
    %v125 = vmax.f32 %v124, 0.0
    %v126 = vstv %s118
    %v127 = vmul.f32 %v126, %v125
    %v128 = vadd.f32 %v117, %v127
    %s129 = sld [smem:[#allocation10 + $0x5]]
    %s130 = sld [smem:[#allocation7 + $0x5]]
    %v131 = vstv %s130
    %v132 = vmul.f32 %v70, %v131
    %s133 = sld [smem:[#allocation8 + $0x5]]
    %v134 = vstv %s133
    %v135 = vadd.f32 %v132, %v134
    %v136 = vmax.f32 %v135, 0.0
    %v137 = vstv %s129
    %v138 = vmul.f32 %v137, %v136
    %v139 = vadd.f32 %v128, %v138
    %s140 = sld [smem:[#allocation10 + $0x6]]
    %s141 = sld [smem:[#allocation7 + $0x6]]
    %v142 = vstv %s141
    %v143 = vmul.f32 %v70, %v142
    %s144 = sld [smem:[#allocation8 + $0x6]]
    %v145 = vstv %s144
    %v146 = vadd.f32 %v143, %v145
    %v147 = vmax.f32 %v146, 0.0
    %v148 = vstv %s140
    %v149 = vmul.f32 %v148, %v147
    %v150 = vadd.f32 %v139, %v149
    %s151 = sld [smem:[#allocation10 + $0x7]]
    %s152 = sld [smem:[#allocation7 + $0x7]]
    %v153 = vstv %s152
    %v154 = vmul.f32 %v70, %v153
    %s155 = sld [smem:[#allocation8 + $0x7]]
    %v156 = vstv %s155
    %v157 = vadd.f32 %v154, %v156
    %v158 = vmax.f32 %v157, 0.0
    %v159 = vstv %s151
    %v160 = vmul.f32 %v159, %v158
    %v161 = vadd.f32 %v150, %v160
    %162 = vst [vmem:[#allocation11] sm:$0xff] %v161
    // Predicated region
    $region38: #{tpu_custom_call.1} parent=1 // pred_check
      _
    $region39: #{tpu_custom_call.1} parent=1 // pred_check_branch
      %164 = sbr.rel (0) target = $region41
    $region40: #{tpu_custom_call.1} parent=1 // pred_region
      %s166 = ssub.s32 128, 128
      %167 = vsyncadd [#allocation5], %s166
      %s169 = sshll.u32 [#allocation11], 4
      %s170 = int_to_ptr.vmem [resolvable:$true] %s169
      %172 = dma.vmem_to_hbm [thread:$0]  %s170, 128, %s5, [#allocation5]
    $region41: #{tpu_custom_call.1} parent=1 // pred_fallthru
      _
    // Predicated region
    $region42: #{tpu_custom_call.1} parent=1 // pred_check
      _
    $region43: #{tpu_custom_call.1} parent=1 // pred_check_branch
      %174 = sbr.rel (0) target = $region45
    $region44: #{tpu_custom_call.1} parent=1 // pred_region
      %175 = dma.done [#allocation5], 128
    $region45: #{tpu_custom_call.1} parent=1 // pred_fallthru
      _
    %176 = vsyncpa [#allocation4], 1
    %177 = vsyncpa [#allocation5], 1
    %178 = vsyncpa [#allocation6], 1
    %179 = vsyncpa [#allocation9], 1

</llo_original>
